<compile_context>
chip_gen: v5e
topology: v5e:2x2
jax: 0.10.0
libtpu: 0.0.40
codegen_flags: <defaults>
</compile_context>

<pallas_src>
import functools

import jax
import jax.numpy as jnp
from jax import lax
from jax.experimental import pallas as pl
from jax.experimental.pallas import tpu as pltpu


def _attention_layer_kernel(q_in_ref, k_in_ref, v_in_ref,
                            wq_ref, wk_ref, wv_ref, wfc_ref,
                            gamma_ref, beta_ref,
                            out_ref,
                            ctx_scratch,
                            *, n_heads, d_k, d_v, eps):
    TB, S, D = q_in_ref.shape
    out_dim = out_ref.shape[-1]
    R = TB * S

    # Flatten the TB batch elements: projections / residual / LayerNorm work on (R, D).
    xq = q_in_ref[...].reshape(R, D)                      # f32 — residual / query input
    xk = k_in_ref[...].reshape(R, D)
    xv = v_in_ref[...].reshape(R, D)

    xq_b = xq.astype(jnp.bfloat16)
    xk_b = xk.astype(jnp.bfloat16)
    xv_b = xv.astype(jnp.bfloat16)

    # Fused full-width projections: one MXU matmul each (N = H*d_k / H*d_v).
    # 1/sqrt(d_k) is already folded into wq_ref by the wrapper.
    q_all = jnp.dot(xq_b, wq_ref[...], preferred_element_type=jnp.float32)   # (R, H*d_k)
    k_all = jnp.dot(xk_b, wk_ref[...], preferred_element_type=jnp.float32)   # (R, H*d_k)
    v_all = jnp.dot(xv_b, wv_ref[...], preferred_element_type=jnp.float32)   # (R, H*d_v)

    q_all = q_all.astype(jnp.bfloat16).reshape(TB, S, n_heads * d_k)
    k_all = k_all.astype(jnp.bfloat16).reshape(TB, S, n_heads * d_k)
    v_all = v_all.astype(jnp.bfloat16).reshape(TB, S, n_heads * d_v)

    # Per-head attention (softmax is per batch element, per head), batched over TB via einsum.
    # H is small here, so a static unroll keeps the live set tiny.
    for h in range(n_heads):
        qh = q_all[:, :, h * d_k:(h + 1) * d_k]            # (TB, S, d_k) bf16
        kh = k_all[:, :, h * d_k:(h + 1) * d_k]            # (TB, S, d_k) bf16
        vh = v_all[:, :, h * d_v:(h + 1) * d_v]            # (TB, S, d_v) bf16

        # scores = q k^T : contract the d_k axis of BOTH operands (no explicit transpose).
        scores = jnp.einsum('bqd,bkd->bqk', qh, kh,
                            preferred_element_type=jnp.float32)              # (TB, S, S) f32

        # Softmax in f32 (v5e-safe); normalization deferred past the PV matmul.
        m = jnp.max(scores, axis=-1, keepdims=True)
        p = jnp.exp(scores - m)
        row_sum = jnp.sum(p, axis=-1, keepdims=True)

        ctx = jnp.einsum('bqk,bkd->bqd', p.astype(jnp.bfloat16), vh,
                         preferred_element_type=jnp.float32)                 # (TB, S, d_v) f32
        ctx2 = ctx.reshape(R, d_v) * pl.reciprocal(row_sum.reshape(R, 1), approx=True)

        # Stash this head's context slab at its lane offset (static masked store).
        ctx_scratch[:, h * d_v:(h + 1) * d_v] = ctx2

    # Single fused output projection on the concatenated context, + residual.
    ctx_all = ctx_scratch[...].astype(jnp.bfloat16)                          # (R, H*d_v)
    o = xq + jnp.dot(ctx_all, wfc_ref[...], preferred_element_type=jnp.float32)   # (R, out_dim)

    # LayerNorm over the last dim (biased variance, affine), all in f32.
    mu = jnp.mean(o, axis=-1, keepdims=True)
    var = jnp.mean((o - mu) ** 2, axis=-1, keepdims=True)
    y = (o - mu) * lax.rsqrt(var + eps)
    y = y * gamma_ref[...] + beta_ref[...]
    out_ref[...] = y.reshape(TB, S, out_dim).astype(out_ref.dtype)


def attention_layer(input_q, input_k, input_v,
                    w_q, w_k, w_v, w_fc, gamma, beta,
                    *, n_heads, d_k, d_v, eps=1e-5, tb=None):
    """input_*: [B, S, input_dim]; w_* are PyTorch-style [out, in] Linear weights."""
    B, S, D = input_q.shape
    out_dim = w_fc.shape[0]
    assert out_dim == D, "residual add (as in the PyTorch module) requires output_dim == input_dim"
    inv_temp = 1.0 / (d_k ** 0.5)

    # Pick how many batch elements to process per grid step: target a reasonably fat
    # activation tile (amortizes per-step pipeline overhead), must divide B.
    if tb is None:
        per_elem_bytes = S * D * 4
        tb = max(1, min(B, (512 * 1024) // max(per_elem_bytes, 1)))
        while B % tb:
            tb -= 1

    # Glue: transpose to [in, out], fold 1/sqrt(d_k) into Wq (in f32), cast MXU weights to bf16.
    wq_full = (jnp.asarray(w_q, jnp.float32).T * inv_temp).astype(jnp.bfloat16)   # (D, H*d_k)
    wk_full = jnp.asarray(w_k, jnp.float32).T.astype(jnp.bfloat16)                # (D, H*d_k)
    wv_full = jnp.asarray(w_v, jnp.float32).T.astype(jnp.bfloat16)                # (D, H*d_v)
    wfc_full = jnp.asarray(w_fc, jnp.float32).T.astype(jnp.bfloat16)              # (H*d_v, out)
    gamma2 = jnp.asarray(gamma, jnp.float32).reshape(1, out_dim)
    beta2 = jnp.asarray(beta, jnp.float32).reshape(1, out_dim)

    kernel = functools.partial(_attention_layer_kernel,
                               n_heads=n_heads, d_k=d_k, d_v=d_v, eps=eps)

    def const_spec(arr):
        nd = arr.ndim
        # Weights / affine params: constant index_map — same (tiny, bf16) block every step.
        return pl.BlockSpec(arr.shape, lambda b: (0,) * nd)

    return pl.pallas_call(
        kernel,
        out_shape=jax.ShapeDtypeStruct((B, S, out_dim), jnp.float32),
        grid_spec=pltpu.PrefetchScalarGridSpec(
            num_scalar_prefetch=0,
            grid=(B // tb,),
            in_specs=[
                pl.BlockSpec((tb, S, D), lambda b: (b, 0, 0)),      # q (residual)
                pl.BlockSpec((tb, S, D), lambda b: (b, 0, 0)),      # k
                pl.BlockSpec((tb, S, D), lambda b: (b, 0, 0)),      # v
                const_spec(wq_full), const_spec(wk_full), const_spec(wv_full), const_spec(wfc_full),
                const_spec(gamma2), const_spec(beta2),
            ],
            out_specs=pl.BlockSpec((tb, S, out_dim), lambda b: (b, 0, 0)),
            scratch_shapes=[pltpu.VMEM((tb * S, n_heads * d_v), jnp.float32)],
        ),
        compiler_params=pltpu.CompilerParams(dimension_semantics=("parallel",)),
    )(input_q, input_k, input_v, wq_full, wk_full, wv_full, wfc_full, gamma2, beta2)


def _reference(input_q, input_k, input_v, w_q, w_k, w_v, w_fc, gamma, beta,
               *, n_heads, d_k, d_v, eps=1e-5):
    B, S, D = input_q.shape
    q = (input_q @ w_q.T).reshape(B, S, n_heads, d_k).transpose(0, 2, 1, 3)
    k = (input_k @ w_k.T).reshape(B, S, n_heads, d_k).transpose(0, 2, 1, 3)
    v = (input_v @ w_v.T).reshape(B, S, n_heads, d_v).transpose(0, 2, 1, 3)
    scores = jnp.einsum('bhqd,bhkd->bhqk', q, k) / (d_k ** 0.5)
    attn = jax.nn.softmax(scores, axis=-1)
    ctx = jnp.einsum('bhqk,bhkd->bhqd', attn, v).transpose(0, 2, 1, 3).reshape(B, S, n_heads * d_v)
    out = ctx @ w_fc.T + input_q
    mu = out.mean(-1, keepdims=True)
    var = ((out - mu) ** 2).mean(-1, keepdims=True)
    return (out - mu) * jax.lax.rsqrt(var + eps) * gamma + beta


if __name__ == "__main__":
    # Small shapes consistent with the module (residual requires output_dim == input_dim).
    B, S = 2, 8
    input_dim = output_dim = 32
    sub_k = sub_v = 8
    head_num = 4

    key = jax.random.PRNGKey(0)
    kq, kk, kv, kwq, kwk, kwv, kwf = jax.random.split(key, 7)

    input_q = jax.random.normal(kq, (B, S, input_dim), jnp.float32)
    input_k = jax.random.normal(kk, (B, S, input_dim), jnp.float32)
    input_v = jax.random.normal(kv, (B, S, input_dim), jnp.float32)

    # Deterministic synthetic parameters (PyTorch Linear weight shape: [out, in]).
    w_q = 0.1 * jax.random.normal(kwq, (sub_k * head_num, input_dim), jnp.float32)
    w_k = 0.1 * jax.random.normal(kwk, (sub_k * head_num, input_dim), jnp.float32)
    w_v = 0.1 * jax.random.normal(kwv, (sub_v * head_num, input_dim), jnp.float32)
    w_fc = 0.1 * jax.random.normal(kwf, (output_dim, head_num * sub_v), jnp.float32)
    gamma = jnp.ones((output_dim,), jnp.float32)   # LayerNorm default affine params
    beta = jnp.zeros((output_dim,), jnp.float32)

    out = attention_layer(input_q, input_k, input_v,
                          w_q, w_k, w_v, w_fc, gamma, beta,
                          n_heads=head_num, d_k=sub_k, d_v=sub_v)
    out = jax.block_until_ready(out)

    ref = _reference(input_q, input_k, input_v, w_q, w_k, w_v, w_fc, gamma, beta,
                     n_heads=head_num, d_k=sub_k, d_v=sub_v)
    assert out.shape == (B, S, output_dim)
    # bf16 MXU operands (+ approx reciprocal) with f32 accumulation: tolerance ~1e-2.
    assert jnp.allclose(out, ref, atol=2e-2, rtol=2e-2), float(jnp.max(jnp.abs(out - ref)))

    print("KERNEL_OK")
</pallas_src>

<mosaic_0001>
module attributes {stable_mosaic.version = 11 : i64} {
  func.func @_attention_layer_kernel(%arg0: i32, %arg1: memref<2x8x32xf32, #tpu.memory_space<vmem>>, %arg2: memref<2x8x32xf32, #tpu.memory_space<vmem>>, %arg3: memref<2x8x32xf32, #tpu.memory_space<vmem>>, %arg4: memref<32x32xbf16, #tpu.memory_space<vmem>>, %arg5: memref<32x32xbf16, #tpu.memory_space<vmem>>, %arg6: memref<32x32xbf16, #tpu.memory_space<vmem>>, %arg7: memref<32x32xbf16, #tpu.memory_space<vmem>>, %arg8: memref<1x32xf32, #tpu.memory_space<vmem>>, %arg9: memref<1x32xf32, #tpu.memory_space<vmem>>, %arg10: memref<2x8x32xf32, #tpu.memory_space<vmem>>, %arg11: memref<16x32xf32, #tpu.memory_space<vmem>>) attributes {dimension_semantics = [#tpu.dimension_semantics<parallel>], iteration_bounds = array<i64: 1>, scalar_prefetch = 0 : i64, scratch_operands = 1 : i64, tpu.core_type = #tpu.core_type<tc>, window_params = [{transform_indices = @transform_0, window_bounds = array<i64: 2, 8, 32>}, {transform_indices = @transform_1, window_bounds = array<i64: 2, 8, 32>}, {transform_indices = @transform_2, window_bounds = array<i64: 2, 8, 32>}, {pipeline_mode = #tpu.pipeline_mode<synchronous>, transform_indices = @transform_3, window_bounds = array<i64: 32, 32>}, {pipeline_mode = #tpu.pipeline_mode<synchronous>, transform_indices = @transform_4, window_bounds = array<i64: 32, 32>}, {pipeline_mode = #tpu.pipeline_mode<synchronous>, transform_indices = @transform_5, window_bounds = array<i64: 32, 32>}, {pipeline_mode = #tpu.pipeline_mode<synchronous>, transform_indices = @transform_6, window_bounds = array<i64: 32, 32>}, {pipeline_mode = #tpu.pipeline_mode<synchronous>, transform_indices = @transform_7, window_bounds = array<i64: 1, 32>}, {pipeline_mode = #tpu.pipeline_mode<synchronous>, transform_indices = @transform_8, window_bounds = array<i64: 1, 32>}, {transform_indices = @transform_9, window_bounds = array<i64: 2, 8, 32>}]} {
    %c0 = arith.constant 0 : index
    %c0_0 = arith.constant 0 : index
    %c0_1 = arith.constant 0 : index
    %0 = vector.load %arg1[%c0, %c0_0, %c0_1] : memref<2x8x32xf32, #tpu.memory_space<vmem>>, vector<2x8x32xf32>
    %1 = vector.shape_cast %0 : vector<2x8x32xf32> to vector<16x32xf32>
    %c0_2 = arith.constant 0 : index
    %c0_3 = arith.constant 0 : index
    %c0_4 = arith.constant 0 : index
    %2 = vector.load %arg2[%c0_2, %c0_3, %c0_4] : memref<2x8x32xf32, #tpu.memory_space<vmem>>, vector<2x8x32xf32>
    %3 = vector.shape_cast %2 : vector<2x8x32xf32> to vector<16x32xf32>
    %c0_5 = arith.constant 0 : index
    %c0_6 = arith.constant 0 : index
    %c0_7 = arith.constant 0 : index
    %4 = vector.load %arg3[%c0_5, %c0_6, %c0_7] : memref<2x8x32xf32, #tpu.memory_space<vmem>>, vector<2x8x32xf32>
    %5 = vector.shape_cast %4 : vector<2x8x32xf32> to vector<16x32xf32>
    %6 = arith.truncf %1 : vector<16x32xf32> to vector<16x32xbf16>
    %7 = arith.truncf %3 : vector<16x32xf32> to vector<16x32xbf16>
    %8 = arith.truncf %5 : vector<16x32xf32> to vector<16x32xbf16>
    %c0_8 = arith.constant 0 : index
    %c0_9 = arith.constant 0 : index
    %9 = vector.load %arg4[%c0_8, %c0_9] : memref<32x32xbf16, #tpu.memory_space<vmem>>, vector<32x32xbf16>
    %cst = arith.constant dense<0.000000e+00> : vector<16x32xf32>
    %10 = tpu.matmul %6, %9, %cst {dimension_numbers = #tpu.dot_dimension_numbers<[1], [0], [0], [1], [0, 0, 1, 1], [], []>} : vector<16x32xbf16>, vector<32x32xbf16>, vector<16x32xf32> -> vector<16x32xf32>
    %c0_10 = arith.constant 0 : index
    %c0_11 = arith.constant 0 : index
    %11 = vector.load %arg5[%c0_10, %c0_11] : memref<32x32xbf16, #tpu.memory_space<vmem>>, vector<32x32xbf16>
    %cst_12 = arith.constant dense<0.000000e+00> : vector<16x32xf32>
    %12 = tpu.matmul %7, %11, %cst_12 {dimension_numbers = #tpu.dot_dimension_numbers<[1], [0], [0], [1], [0, 0, 1, 1], [], []>} : vector<16x32xbf16>, vector<32x32xbf16>, vector<16x32xf32> -> vector<16x32xf32>
    %c0_13 = arith.constant 0 : index
    %c0_14 = arith.constant 0 : index
    %13 = vector.load %arg6[%c0_13, %c0_14] : memref<32x32xbf16, #tpu.memory_space<vmem>>, vector<32x32xbf16>
    %cst_15 = arith.constant dense<0.000000e+00> : vector<16x32xf32>
    %14 = tpu.matmul %8, %13, %cst_15 {dimension_numbers = #tpu.dot_dimension_numbers<[1], [0], [0], [1], [0, 0, 1, 1], [], []>} : vector<16x32xbf16>, vector<32x32xbf16>, vector<16x32xf32> -> vector<16x32xf32>
    %15 = arith.truncf %10 : vector<16x32xf32> to vector<16x32xbf16>
    %16 = vector.shape_cast %15 : vector<16x32xbf16> to vector<2x8x32xbf16>
    %17 = arith.truncf %12 : vector<16x32xf32> to vector<16x32xbf16>
    %18 = vector.shape_cast %17 : vector<16x32xbf16> to vector<2x8x32xbf16>
    %19 = arith.truncf %14 : vector<16x32xf32> to vector<16x32xbf16>
    %20 = vector.shape_cast %19 : vector<16x32xbf16> to vector<2x8x32xbf16>
    %21 = vector.extract_strided_slice %16 {offsets = [0, 0, 0], sizes = [2, 8, 8], strides = [1, 1, 1]} : vector<2x8x32xbf16> to vector<2x8x8xbf16>
    %22 = vector.extract_strided_slice %18 {offsets = [0, 0, 0], sizes = [2, 8, 8], strides = [1, 1, 1]} : vector<2x8x32xbf16> to vector<2x8x8xbf16>
    %23 = vector.extract_strided_slice %20 {offsets = [0, 0, 0], sizes = [2, 8, 8], strides = [1, 1, 1]} : vector<2x8x32xbf16> to vector<2x8x8xbf16>
    "tpu.trace_start"() <{level = 10 : i32, message = "bqd,bkd->bqk"}> : () -> ()
    %cst_16 = arith.constant dense<0.000000e+00> : vector<2x8x8xf32>
    %24 = tpu.matmul %21, %22, %cst_16 {dimension_numbers = #tpu.dot_dimension_numbers<[2], [2], [1], [1], [0, 0, 0, 1, 1, 1], [0], [0]>} : vector<2x8x8xbf16>, vector<2x8x8xbf16>, vector<2x8x8xf32> -> vector<2x8x8xf32>
    "tpu.trace_stop"() : () -> ()
    %cst_17 = arith.constant dense<0xFF800000> : vector<2x8xf32>
    %25 = vector.multi_reduction <maximumf>, %24, %cst_17 [2] : vector<2x8x8xf32> to vector<2x8xf32>
    %26 = vector.shape_cast %25 : vector<2x8xf32> to vector<2x8x1xf32>
    %27 = vector.broadcast %26 : vector<2x8x1xf32> to vector<2x8x8xf32>
    %28 = arith.subf %24, %27 : vector<2x8x8xf32>
    %29 = math.exp %28 : vector<2x8x8xf32>
    %cst_18 = arith.constant dense<0.000000e+00> : vector<2x8xf32>
    %30 = vector.multi_reduction <add>, %29, %cst_18 [2] : vector<2x8x8xf32> to vector<2x8xf32>
    %31 = vector.shape_cast %30 : vector<2x8xf32> to vector<2x8x1xf32>
    %32 = arith.truncf %29 : vector<2x8x8xf32> to vector<2x8x8xbf16>
    "tpu.trace_start"() <{level = 10 : i32, message = "bqk,bkd->bqd"}> : () -> ()
    %cst_19 = arith.constant dense<0.000000e+00> : vector<2x8x8xf32>
    %33 = tpu.matmul %32, %23, %cst_19 {dimension_numbers = #tpu.dot_dimension_numbers<[2], [1], [1], [2], [0, 0, 0, 1, 1, 2], [0], [0]>} : vector<2x8x8xbf16>, vector<2x8x8xbf16>, vector<2x8x8xf32> -> vector<2x8x8xf32>
    "tpu.trace_stop"() : () -> ()
    %34 = vector.shape_cast %33 : vector<2x8x8xf32> to vector<16x8xf32>
    %35 = vector.shape_cast %31 : vector<2x8x1xf32> to vector<16x1xf32>
    %36 = tpu.reciprocal %35 {approx = true} : vector<16x1xf32> -> vector<16x1xf32>
    %37 = vector.broadcast %36 : vector<16x1xf32> to vector<16x8xf32>
    %38 = arith.mulf %34, %37 : vector<16x8xf32>
    %c0_20 = arith.constant 0 : index
    %c0_21 = arith.constant 0 : index
    %39 = vector.load %arg11[%c0_20, %c0_21] : memref<16x32xf32, #tpu.memory_space<vmem>>, vector<16x8xf32>
    tpu.vector_store %arg11[%c0_20, %c0_21], %38 {strides = array<i32>} : memref<16x32xf32, #tpu.memory_space<vmem>>, vector<16x8xf32>,
    %40 = vector.extract_strided_slice %16 {offsets = [0, 0, 8], sizes = [2, 8, 8], strides = [1, 1, 1]} : vector<2x8x32xbf16> to vector<2x8x8xbf16>
    %41 = vector.extract_strided_slice %18 {offsets = [0, 0, 8], sizes = [2, 8, 8], strides = [1, 1, 1]} : vector<2x8x32xbf16> to vector<2x8x8xbf16>
    %42 = vector.extract_strided_slice %20 {offsets = [0, 0, 8], sizes = [2, 8, 8], strides = [1, 1, 1]} : vector<2x8x32xbf16> to vector<2x8x8xbf16>
    "tpu.trace_start"() <{level = 10 : i32, message = "bqd,bkd->bqk"}> : () -> ()
    %cst_22 = arith.constant dense<0.000000e+00> : vector<2x8x8xf32>
    %43 = tpu.matmul %40, %41, %cst_22 {dimension_numbers = #tpu.dot_dimension_numbers<[2], [2], [1], [1], [0, 0, 0, 1, 1, 1], [0], [0]>} : vector<2x8x8xbf16>, vector<2x8x8xbf16>, vector<2x8x8xf32> -> vector<2x8x8xf32>
    "tpu.trace_stop"() : () -> ()
    %cst_23 = arith.constant dense<0xFF800000> : vector<2x8xf32>
    %44 = vector.multi_reduction <maximumf>, %43, %cst_23 [2] : vector<2x8x8xf32> to vector<2x8xf32>
    %45 = vector.shape_cast %44 : vector<2x8xf32> to vector<2x8x1xf32>
    %46 = vector.broadcast %45 : vector<2x8x1xf32> to vector<2x8x8xf32>
    %47 = arith.subf %43, %46 : vector<2x8x8xf32>
    %48 = math.exp %47 : vector<2x8x8xf32>
    %cst_24 = arith.constant dense<0.000000e+00> : vector<2x8xf32>
    %49 = vector.multi_reduction <add>, %48, %cst_24 [2] : vector<2x8x8xf32> to vector<2x8xf32>
    %50 = vector.shape_cast %49 : vector<2x8xf32> to vector<2x8x1xf32>
    %51 = arith.truncf %48 : vector<2x8x8xf32> to vector<2x8x8xbf16>
    "tpu.trace_start"() <{level = 10 : i32, message = "bqk,bkd->bqd"}> : () -> ()
    %cst_25 = arith.constant dense<0.000000e+00> : vector<2x8x8xf32>
    %52 = tpu.matmul %51, %42, %cst_25 {dimension_numbers = #tpu.dot_dimension_numbers<[2], [1], [1], [2], [0, 0, 0, 1, 1, 2], [0], [0]>} : vector<2x8x8xbf16>, vector<2x8x8xbf16>, vector<2x8x8xf32> -> vector<2x8x8xf32>
    "tpu.trace_stop"() : () -> ()
    %53 = vector.shape_cast %52 : vector<2x8x8xf32> to vector<16x8xf32>
    %54 = vector.shape_cast %50 : vector<2x8x1xf32> to vector<16x1xf32>
    %55 = tpu.reciprocal %54 {approx = true} : vector<16x1xf32> -> vector<16x1xf32>
    %56 = vector.broadcast %55 : vector<16x1xf32> to vector<16x8xf32>
    %57 = arith.mulf %53, %56 : vector<16x8xf32>
    %c0_26 = arith.constant 0 : index
    %c8 = arith.constant 8 : index
    %58 = vector.load %arg11[%c0_26, %c8] : memref<16x32xf32, #tpu.memory_space<vmem>>, vector<16x8xf32>
    tpu.vector_store %arg11[%c0_26, %c8], %57 {strides = array<i32>} : memref<16x32xf32, #tpu.memory_space<vmem>>, vector<16x8xf32>,
    %59 = vector.extract_strided_slice %16 {offsets = [0, 0, 16], sizes = [2, 8, 8], strides = [1, 1, 1]} : vector<2x8x32xbf16> to vector<2x8x8xbf16>
    %60 = vector.extract_strided_slice %18 {offsets = [0, 0, 16], sizes = [2, 8, 8], strides = [1, 1, 1]} : vector<2x8x32xbf16> to vector<2x8x8xbf16>
    %61 = vector.extract_strided_slice %20 {offsets = [0, 0, 16], sizes = [2, 8, 8], strides = [1, 1, 1]} : vector<2x8x32xbf16> to vector<2x8x8xbf16>
    "tpu.trace_start"() <{level = 10 : i32, message = "bqd,bkd->bqk"}> : () -> ()
    %cst_27 = arith.constant dense<0.000000e+00> : vector<2x8x8xf32>
    %62 = tpu.matmul %59, %60, %cst_27 {dimension_numbers = #tpu.dot_dimension_numbers<[2], [2], [1], [1], [0, 0, 0, 1, 1, 1], [0], [0]>} : vector<2x8x8xbf16>, vector<2x8x8xbf16>, vector<2x8x8xf32> -> vector<2x8x8xf32>
    "tpu.trace_stop"() : () -> ()
    %cst_28 = arith.constant dense<0xFF800000> : vector<2x8xf32>
    %63 = vector.multi_reduction <maximumf>, %62, %cst_28 [2] : vector<2x8x8xf32> to vector<2x8xf32>
    %64 = vector.shape_cast %63 : vector<2x8xf32> to vector<2x8x1xf32>
    %65 = vector.broadcast %64 : vector<2x8x1xf32> to vector<2x8x8xf32>
    %66 = arith.subf %62, %65 : vector<2x8x8xf32>
    %67 = math.exp %66 : vector<2x8x8xf32>
    %cst_29 = arith.constant dense<0.000000e+00> : vector<2x8xf32>
    %68 = vector.multi_reduction <add>, %67, %cst_29 [2] : vector<2x8x8xf32> to vector<2x8xf32>
    %69 = vector.shape_cast %68 : vector<2x8xf32> to vector<2x8x1xf32>
    %70 = arith.truncf %67 : vector<2x8x8xf32> to vector<2x8x8xbf16>
    "tpu.trace_start"() <{level = 10 : i32, message = "bqk,bkd->bqd"}> : () -> ()
    %cst_30 = arith.constant dense<0.000000e+00> : vector<2x8x8xf32>
    %71 = tpu.matmul %70, %61, %cst_30 {dimension_numbers = #tpu.dot_dimension_numbers<[2], [1], [1], [2], [0, 0, 0, 1, 1, 2], [0], [0]>} : vector<2x8x8xbf16>, vector<2x8x8xbf16>, vector<2x8x8xf32> -> vector<2x8x8xf32>
    "tpu.trace_stop"() : () -> ()
    %72 = vector.shape_cast %71 : vector<2x8x8xf32> to vector<16x8xf32>
    %73 = vector.shape_cast %69 : vector<2x8x1xf32> to vector<16x1xf32>
    %74 = tpu.reciprocal %73 {approx = true} : vector<16x1xf32> -> vector<16x1xf32>
    %75 = vector.broadcast %74 : vector<16x1xf32> to vector<16x8xf32>
    %76 = arith.mulf %72, %75 : vector<16x8xf32>
    %c0_31 = arith.constant 0 : index
    %c16 = arith.constant 16 : index
    %77 = vector.load %arg11[%c0_31, %c16] : memref<16x32xf32, #tpu.memory_space<vmem>>, vector<16x8xf32>
    tpu.vector_store %arg11[%c0_31, %c16], %76 {strides = array<i32>} : memref<16x32xf32, #tpu.memory_space<vmem>>, vector<16x8xf32>,
    %78 = vector.extract_strided_slice %16 {offsets = [0, 0, 24], sizes = [2, 8, 8], strides = [1, 1, 1]} : vector<2x8x32xbf16> to vector<2x8x8xbf16>
    %79 = vector.extract_strided_slice %18 {offsets = [0, 0, 24], sizes = [2, 8, 8], strides = [1, 1, 1]} : vector<2x8x32xbf16> to vector<2x8x8xbf16>
    %80 = vector.extract_strided_slice %20 {offsets = [0, 0, 24], sizes = [2, 8, 8], strides = [1, 1, 1]} : vector<2x8x32xbf16> to vector<2x8x8xbf16>
    "tpu.trace_start"() <{level = 10 : i32, message = "bqd,bkd->bqk"}> : () -> ()
    %cst_32 = arith.constant dense<0.000000e+00> : vector<2x8x8xf32>
    %81 = tpu.matmul %78, %79, %cst_32 {dimension_numbers = #tpu.dot_dimension_numbers<[2], [2], [1], [1], [0, 0, 0, 1, 1, 1], [0], [0]>} : vector<2x8x8xbf16>, vector<2x8x8xbf16>, vector<2x8x8xf32> -> vector<2x8x8xf32>
    "tpu.trace_stop"() : () -> ()
    %cst_33 = arith.constant dense<0xFF800000> : vector<2x8xf32>
    %82 = vector.multi_reduction <maximumf>, %81, %cst_33 [2] : vector<2x8x8xf32> to vector<2x8xf32>
    %83 = vector.shape_cast %82 : vector<2x8xf32> to vector<2x8x1xf32>
    %84 = vector.broadcast %83 : vector<2x8x1xf32> to vector<2x8x8xf32>
    %85 = arith.subf %81, %84 : vector<2x8x8xf32>
    %86 = math.exp %85 : vector<2x8x8xf32>
    %cst_34 = arith.constant dense<0.000000e+00> : vector<2x8xf32>
    %87 = vector.multi_reduction <add>, %86, %cst_34 [2] : vector<2x8x8xf32> to vector<2x8xf32>
    %88 = vector.shape_cast %87 : vector<2x8xf32> to vector<2x8x1xf32>
    %89 = arith.truncf %86 : vector<2x8x8xf32> to vector<2x8x8xbf16>
    "tpu.trace_start"() <{level = 10 : i32, message = "bqk,bkd->bqd"}> : () -> ()
    %cst_35 = arith.constant dense<0.000000e+00> : vector<2x8x8xf32>
    %90 = tpu.matmul %89, %80, %cst_35 {dimension_numbers = #tpu.dot_dimension_numbers<[2], [1], [1], [2], [0, 0, 0, 1, 1, 2], [0], [0]>} : vector<2x8x8xbf16>, vector<2x8x8xbf16>, vector<2x8x8xf32> -> vector<2x8x8xf32>
    "tpu.trace_stop"() : () -> ()
    %91 = vector.shape_cast %90 : vector<2x8x8xf32> to vector<16x8xf32>
    %92 = vector.shape_cast %88 : vector<2x8x1xf32> to vector<16x1xf32>
    %93 = tpu.reciprocal %92 {approx = true} : vector<16x1xf32> -> vector<16x1xf32>
    %94 = vector.broadcast %93 : vector<16x1xf32> to vector<16x8xf32>
    %95 = arith.mulf %91, %94 : vector<16x8xf32>
    %c0_36 = arith.constant 0 : index
    %c24 = arith.constant 24 : index
    %96 = vector.load %arg11[%c0_36, %c24] : memref<16x32xf32, #tpu.memory_space<vmem>>, vector<16x8xf32>
    tpu.vector_store %arg11[%c0_36, %c24], %95 {strides = array<i32>} : memref<16x32xf32, #tpu.memory_space<vmem>>, vector<16x8xf32>,
    %c0_37 = arith.constant 0 : index
    %c0_38 = arith.constant 0 : index
    %97 = vector.load %arg11[%c0_37, %c0_38] : memref<16x32xf32, #tpu.memory_space<vmem>>, vector<16x32xf32>
    %98 = arith.truncf %97 : vector<16x32xf32> to vector<16x32xbf16>
    %c0_39 = arith.constant 0 : index
    %c0_40 = arith.constant 0 : index
    %99 = vector.load %arg7[%c0_39, %c0_40] : memref<32x32xbf16, #tpu.memory_space<vmem>>, vector<32x32xbf16>
    %cst_41 = arith.constant dense<0.000000e+00> : vector<16x32xf32>
    %100 = tpu.matmul %98, %99, %cst_41 {dimension_numbers = #tpu.dot_dimension_numbers<[1], [0], [0], [1], [0, 0, 1, 1], [], []>} : vector<16x32xbf16>, vector<32x32xbf16>, vector<16x32xf32> -> vector<16x32xf32>
    %101 = arith.addf %1, %100 : vector<16x32xf32>
    %cst_42 = arith.constant dense<0.000000e+00> : vector<16xf32>
    %102 = vector.multi_reduction <add>, %101, %cst_42 [1] : vector<16x32xf32> to vector<16xf32>
    %103 = vector.shape_cast %102 : vector<16xf32> to vector<16x1xf32>
    %cst_43 = arith.constant 3.200000e+01 : f32
    %104 = vector.broadcast %cst_43 : f32 to vector<16x1xf32>
    %105 = arith.divf %103, %104 : vector<16x1xf32>
    %106 = vector.broadcast %105 : vector<16x1xf32> to vector<16x32xf32>
    %107 = arith.subf %101, %106 : vector<16x32xf32>
    %108 = arith.mulf %107, %107 : vector<16x32xf32>
    %cst_44 = arith.constant dense<0.000000e+00> : vector<16xf32>
    %109 = vector.multi_reduction <add>, %108, %cst_44 [1] : vector<16x32xf32> to vector<16xf32>
    %110 = vector.shape_cast %109 : vector<16xf32> to vector<16x1xf32>
    %cst_45 = arith.constant 3.200000e+01 : f32
    %111 = vector.broadcast %cst_45 : f32 to vector<16x1xf32>
    %112 = arith.divf %110, %111 : vector<16x1xf32>
    %113 = vector.broadcast %105 : vector<16x1xf32> to vector<16x32xf32>
    %114 = arith.subf %101, %113 : vector<16x32xf32>
    %cst_46 = arith.constant 9.99999974E-6 : f32
    %115 = vector.broadcast %cst_46 : f32 to vector<16x1xf32>
    %116 = arith.addf %112, %115 : vector<16x1xf32>
    %117 = math.rsqrt %116 : vector<16x1xf32>
    %118 = vector.broadcast %117 : vector<16x1xf32> to vector<16x32xf32>
    %119 = arith.mulf %114, %118 : vector<16x32xf32>
    %c0_47 = arith.constant 0 : index
    %c0_48 = arith.constant 0 : index
    %120 = vector.load %arg8[%c0_47, %c0_48] : memref<1x32xf32, #tpu.memory_space<vmem>>, vector<1x32xf32>
    %121 = vector.broadcast %120 : vector<1x32xf32> to vector<16x32xf32>
    %122 = arith.mulf %119, %121 : vector<16x32xf32>
    %c0_49 = arith.constant 0 : index
    %c0_50 = arith.constant 0 : index
    %123 = vector.load %arg9[%c0_49, %c0_50] : memref<1x32xf32, #tpu.memory_space<vmem>>, vector<1x32xf32>
    %124 = vector.broadcast %123 : vector<1x32xf32> to vector<16x32xf32>
    %125 = arith.addf %122, %124 : vector<16x32xf32>
    %126 = vector.shape_cast %125 : vector<16x32xf32> to vector<2x8x32xf32>
    %c0_51 = arith.constant 0 : index
    %c0_52 = arith.constant 0 : index
    %c0_53 = arith.constant 0 : index
    %127 = vector.load %arg10[%c0_51, %c0_52, %c0_53] : memref<2x8x32xf32, #tpu.memory_space<vmem>>, vector<2x8x32xf32>
    tpu.vector_store %arg10[%c0_51, %c0_52, %c0_53], %126 {strides = array<i32>} : memref<2x8x32xf32, #tpu.memory_space<vmem>>, vector<2x8x32xf32>,
    return
  }
  func.func @transform_0(%arg0: i32) -> (i32, i32, i32) {
    %c0_i32 = arith.constant 0 : i32
    %c0_i32_0 = arith.constant 0 : i32
    %c0_i32_1 = arith.constant 0 : i32
    return %arg0, %c0_i32, %c0_i32_0 : i32, i32, i32
  }
  func.func @transform_1(%arg0: i32) -> (i32, i32, i32) {
    %c0_i32 = arith.constant 0 : i32
    %c0_i32_0 = arith.constant 0 : i32
    %c0_i32_1 = arith.constant 0 : i32
    return %arg0, %c0_i32, %c0_i32_0 : i32, i32, i32
  }
  func.func @transform_2(%arg0: i32) -> (i32, i32, i32) {
    %c0_i32 = arith.constant 0 : i32
    %c0_i32_0 = arith.constant 0 : i32
    %c0_i32_1 = arith.constant 0 : i32
    return %arg0, %c0_i32, %c0_i32_0 : i32, i32, i32
  }
  func.func @transform_3(%arg0: i32) -> (i32, i32) {
    %c0_i32 = arith.constant 0 : i32
    %c0_i32_0 = arith.constant 0 : i32
    %c0_i32_1 = arith.constant 0 : i32
    return %c0_i32, %c0_i32_0 : i32, i32
  }
  func.func @transform_4(%arg0: i32) -> (i32, i32) {
    %c0_i32 = arith.constant 0 : i32
    %c0_i32_0 = arith.constant 0 : i32
    %c0_i32_1 = arith.constant 0 : i32
    return %c0_i32, %c0_i32_0 : i32, i32
  }
  func.func @transform_5(%arg0: i32) -> (i32, i32) {
    %c0_i32 = arith.constant 0 : i32
    %c0_i32_0 = arith.constant 0 : i32
    %c0_i32_1 = arith.constant 0 : i32
    return %c0_i32, %c0_i32_0 : i32, i32
  }
  func.func @transform_6(%arg0: i32) -> (i32, i32) {
    %c0_i32 = arith.constant 0 : i32
    %c0_i32_0 = arith.constant 0 : i32
    %c0_i32_1 = arith.constant 0 : i32
    return %c0_i32, %c0_i32_0 : i32, i32
  }
  func.func @transform_7(%arg0: i32) -> (i32, i32) {
    %c0_i32 = arith.constant 0 : i32
    %c0_i32_0 = arith.constant 0 : i32
    %c0_i32_1 = arith.constant 0 : i32
    return %c0_i32, %c0_i32_0 : i32, i32
  }
  func.func @transform_8(%arg0: i32) -> (i32, i32) {
    %c0_i32 = arith.constant 0 : i32
    %c0_i32_0 = arith.constant 0 : i32
    %c0_i32_1 = arith.constant 0 : i32
    return %c0_i32, %c0_i32_0 : i32, i32
  }
  func.func @transform_9(%arg0: i32) -> (i32, i32, i32) {
    %c0_i32 = arith.constant 0 : i32
    %c0_i32_0 = arith.constant 0 : i32
    %c0_i32_1 = arith.constant 0 : i32
    return %arg0, %c0_i32, %c0_i32_0 : i32, i32, i32
  }
}

</mosaic_0001>

<llo_original>
// kernel: tpu_custom_call.1
$region0: #{tpu_custom_call.1}
  #allocation0 [shape = 'u32[]', space=smem, size = 0x4, offset = 0x4, fixed_abs, tag = 'smem constant byte address 0x4 - core index']
  #allocation1 [shape = 'u32[72,128]{1,0:T(1,128)}', space=vmem, size = 0x9000, scoped, tag = 'internal scratch']
  #allocation2 [shape = 'f32[16,32]{1,0:T(8,128)}', space=vmem, size = 0x2000, scoped, tag = 'scratch operand']
  %s0 = inlined_call_operand.hbm [shape: f32[2,8,32], index: 0, kind: input, shape index: {}]
  %s1 = inlined_call_operand.hbm [shape: f32[2,8,32], index: 1, kind: input, shape index: {}]
  %s2 = inlined_call_operand.hbm [shape: f32[2,8,32], index: 2, kind: input, shape index: {}]
  %s3 = inlined_call_operand.hbm [shape: bf16[32,32], index: 3, kind: input, shape index: {}]
  %s4 = inlined_call_operand.hbm [shape: bf16[32,32], index: 4, kind: input, shape index: {}]
  %s5 = inlined_call_operand.hbm [shape: bf16[32,32], index: 5, kind: input, shape index: {}]
  %s6 = inlined_call_operand.hbm [shape: bf16[32,32], index: 6, kind: input, shape index: {}]
  %s7 = inlined_call_operand.vmem [shape: f32[1,32], index: 7, kind: input, shape index: {}]
  %s8 = inlined_call_operand.vmem [shape: f32[1,32], index: 8, kind: input, shape index: {}]
  %s9 = inlined_call_operand.hbm [shape: f32[2,8,32], index: 9, kind: output, shape index: {}]
  %s10 = sld [smem:[#allocation0]]
  $region74: #{tpu_custom_call.1} parent=0
    _
  %s12 = ssub.s32 1, %s10
  %s13 = scalar_select 0, %s12, %s10
  $region1: #{tpu_custom_call.1} parent=0
    #allocation3 [shape = 'u8[8192]{0}', space=vmem, size = 0x2000, scoped, tag = 'input window, operand 0, single buffered']
    #allocation4 [shape = 's32[1]{0}', space=sflag, size = 0x4, scoped, tag = 'scoped memory for tpu_custom_call.1']
    #allocation5 [shape = 's32[1]{0}', space=sflag, size = 0x4, scoped, tag = 'scoped memory for tpu_custom_call.1']
    #allocation6 [shape = 'u8[8192]{0}', space=vmem, size = 0x2000, scoped, tag = 'input window, operand 1, single buffered']
    #allocation7 [shape = 's32[1]{0}', space=sflag, size = 0x4, scoped, tag = 'scoped memory for tpu_custom_call.1']
    #allocation8 [shape = 'u8[8192]{0}', space=vmem, size = 0x2000, scoped, tag = 'input window, operand 2, single buffered']
    #allocation9 [shape = 'u8[8192]{0}', space=vmem, size = 0x2000, scoped, tag = 'input window, operand 3, single buffered']
    #allocation10 [shape = 's32[1]{0}', space=sflag, size = 0x4, scoped, tag = 'scoped memory for tpu_custom_call.1']
    #allocation11 [shape = 'u8[8192]{0}', space=vmem, size = 0x2000, scoped, tag = 'input window, operand 4, single buffered']
    #allocation12 [shape = 'u8[8192]{0}', space=vmem, size = 0x2000, scoped, tag = 'input window, operand 5, single buffered']
    #allocation13 [shape = 's32[1]{0}', space=sflag, size = 0x4, scoped, tag = 'scoped memory for tpu_custom_call.1']
    #allocation14 [shape = 'u8[8192]{0}', space=vmem, size = 0x2000, scoped, tag = 'input window, operand 6, single buffered']
    #allocation15 [shape = 'u8[8192]{0}', space=vmem, size = 0x2000, scoped, tag = 'output window, operand 0, single buffered']
    %14 = vsyncpa [#allocation4], 0
    %15 = vsyncpa [#allocation7], 0
    %16 = vsyncpa [#allocation10], 0
    %17 = vsyncpa [#allocation13], 0
    %18 = vsyncpa [#allocation5], 0
    // Predicated region
    $region2: #{tpu_custom_call.1} parent=1 // pred_check
      _
    $region3: #{tpu_custom_call.1} parent=1 // pred_check_branch
      %20 = sbr.rel (0) target = $region5
    $region4: #{tpu_custom_call.1} parent=1 // pred_region
      %22 = vsyncadd [#allocation4], 0
      %s23 = sshll.u32 %s0, 4
      %s24 = int_to_ptr.hbm [resolvable:$true] %s23
      %s25 = sshll.u32 [#allocation3], 4
      %s26 = int_to_ptr.vmem [resolvable:$true] %s25
      %31 = dma.hbm_to_vmem [thread:$0]  %s24, 256, %s26, [#allocation4], 128, 128, 8
    $region5: #{tpu_custom_call.1} parent=1 // pred_fallthru
      _
    // Predicated region
    $region6: #{tpu_custom_call.1} parent=1 // pred_check
      _
    $region7: #{tpu_custom_call.1} parent=1 // pred_check_branch
      %33 = sbr.rel (0) target = $region9
    $region8: #{tpu_custom_call.1} parent=1 // pred_region
      %35 = vsyncadd [#allocation7], 0
      %s36 = sshll.u32 %s1, 4
      %s37 = int_to_ptr.hbm [resolvable:$true] %s36
      %s38 = sshll.u32 [#allocation6], 4
      %s39 = int_to_ptr.vmem [resolvable:$true] %s38
      %44 = dma.hbm_to_vmem [thread:$0]  %s37, 256, %s39, [#allocation7], 128, 128, 8
    $region9: #{tpu_custom_call.1} parent=1 // pred_fallthru
      _
    // Predicated region
    $region10: #{tpu_custom_call.1} parent=1 // pred_check
      _
    $region11: #{tpu_custom_call.1} parent=1 // pred_check_branch
      %46 = sbr.rel (0) target = $region13
    $region12: #{tpu_custom_call.1} parent=1 // pred_region
      %48 = vsyncadd [#allocation7], 0
      %s49 = sshll.u32 %s2, 4
      %s50 = int_to_ptr.hbm [resolvable:$true] %s49
      %s51 = sshll.u32 [#allocation8], 4
      %s52 = int_to_ptr.vmem [resolvable:$true] %s51
      %57 = dma.hbm_to_vmem [thread:$0]  %s50, 256, %s52, [#allocation7], 128, 128, 8
    $region13: #{tpu_custom_call.1} parent=1 // pred_fallthru
      _
    // Predicated region
    $region14: #{tpu_custom_call.1} parent=1 // pred_check
      _
    $region15: #{tpu_custom_call.1} parent=1 // pred_check_branch
      %59 = sbr.rel (0) target = $region17
    $region16: #{tpu_custom_call.1} parent=1 // pred_region
      %61 = vsyncadd [#allocation10], 0
      %s62 = sshll.u32 %s3, 4
      %s63 = int_to_ptr.hbm [resolvable:$true] %s62
      %s64 = sshll.u32 [#allocation9], 4
      %s65 = int_to_ptr.vmem [resolvable:$true] %s64
      %70 = dma.hbm_to_vmem [thread:$0]  %s63, 256, %s65, [#allocation10], 64, 64, 4
    $region17: #{tpu_custom_call.1} parent=1 // pred_fallthru
      _
    // Predicated region
    $region18: #{tpu_custom_call.1} parent=1 // pred_check
      _
    $region19: #{tpu_custom_call.1} parent=1 // pred_check_branch
      %72 = sbr.rel (0) target = $region21
    $region20: #{tpu_custom_call.1} parent=1 // pred_region
      %74 = vsyncadd [#allocation10], 0
      %s75 = sshll.u32 %s4, 4
      %s76 = int_to_ptr.hbm [resolvable:$true] %s75
      %s77 = sshll.u32 [#allocation11], 4
      %s78 = int_to_ptr.vmem [resolvable:$true] %s77
      %83 = dma.hbm_to_vmem [thread:$0]  %s76, 256, %s78, [#allocation10], 64, 64, 4
    $region21: #{tpu_custom_call.1} parent=1 // pred_fallthru
      _
    // Predicated region
    $region22: #{tpu_custom_call.1} parent=1 // pred_check
      _
    $region23: #{tpu_custom_call.1} parent=1 // pred_check_branch
      %85 = sbr.rel (0) target = $region25
    $region24: #{tpu_custom_call.1} parent=1 // pred_region
      %87 = vsyncadd [#allocation13], 0
      %s88 = sshll.u32 %s5, 4
      %s89 = int_to_ptr.hbm [resolvable:$true] %s88
      %s90 = sshll.u32 [#allocation12], 4
      %s91 = int_to_ptr.vmem [resolvable:$true] %s90
      %96 = dma.hbm_to_vmem [thread:$0]  %s89, 256, %s91, [#allocation13], 64, 64, 4
    $region25: #{tpu_custom_call.1} parent=1 // pred_fallthru
      _
    // Predicated region
    $region26: #{tpu_custom_call.1} parent=1 // pred_check
      _
    $region27: #{tpu_custom_call.1} parent=1 // pred_check_branch
      %98 = sbr.rel (0) target = $region29
    $region28: #{tpu_custom_call.1} parent=1 // pred_region
      %100 = vsyncadd [#allocation13], 0
      %s101 = sshll.u32 %s6, 4
      %s102 = int_to_ptr.hbm [resolvable:$true] %s101
      %s103 = sshll.u32 [#allocation14], 4
      %s104 = int_to_ptr.vmem [resolvable:$true] %s103
      %109 = dma.hbm_to_vmem [thread:$0]  %s102, 256, %s104, [#allocation13], 64, 64, 4
    $region29: #{tpu_custom_call.1} parent=1 // pred_fallthru
      _
    // Predicated region
    $region30: #{tpu_custom_call.1} parent=1 // pred_check
      _
    $region31: #{tpu_custom_call.1} parent=1 // pred_check_branch
      %111 = sbr.rel (0) target = $region33
    $region32: #{tpu_custom_call.1} parent=1 // pred_region
      _
    $region33: #{tpu_custom_call.1} parent=1 // pred_fallthru
      _
    // Predicated region
    $region34: #{tpu_custom_call.1} parent=1 // pred_check
      _
    $region35: #{tpu_custom_call.1} parent=1 // pred_check_branch
      %113 = sbr.rel (0) target = $region37
    $region36: #{tpu_custom_call.1} parent=1 // pred_region
      _
    $region37: #{tpu_custom_call.1} parent=1 // pred_fallthru
      _
    // Predicated region
    $region38: #{tpu_custom_call.1} parent=1 // pred_check
      _
    $region39: #{tpu_custom_call.1} parent=1 // pred_check_branch
      %115 = sbr.rel (0) target = $region41
    $region40: #{tpu_custom_call.1} parent=1 // pred_region
      %117 = dma.done [#allocation4], 256
    $region41: #{tpu_custom_call.1} parent=1 // pred_fallthru
      _
    // Predicated region
    $region42: #{tpu_custom_call.1} parent=1 // pred_check
      _
    $region43: #{tpu_custom_call.1} parent=1 // pred_check_branch
      %119 = sbr.rel (0) target = $region45
    $region44: #{tpu_custom_call.1} parent=1 // pred_region
      %121 = dma.done [#allocation7], 256
    $region45: #{tpu_custom_call.1} parent=1 // pred_fallthru
      _
    // Predicated region
    $region46: #{tpu_custom_call.1} parent=1 // pred_check
      _
    $region47: #{tpu_custom_call.1} parent=1 // pred_check_branch
      %123 = sbr.rel (0) target = $region49
    $region48: #{tpu_custom_call.1} parent=1 // pred_region
      %125 = dma.done [#allocation7], 256
    $region49: #{tpu_custom_call.1} parent=1 // pred_fallthru
      _
    // Predicated region
    $region50: #{tpu_custom_call.1} parent=1 // pred_check
      _
    $region51: #{tpu_custom_call.1} parent=1 // pred_check_branch
      %127 = sbr.rel (0) target = $region53
    $region52: #{tpu_custom_call.1} parent=1 // pred_region
      %129 = dma.done [#allocation10], 256
    $region53: #{tpu_custom_call.1} parent=1 // pred_fallthru
      _
    // Predicated region
    $region54: #{tpu_custom_call.1} parent=1 // pred_check
      _
    $region55: #{tpu_custom_call.1} parent=1 // pred_check_branch
      %131 = sbr.rel (0) target = $region57
    $region56: #{tpu_custom_call.1} parent=1 // pred_region
      %133 = dma.done [#allocation10], 256
    $region57: #{tpu_custom_call.1} parent=1 // pred_fallthru
      _
    // Predicated region
    $region58: #{tpu_custom_call.1} parent=1 // pred_check
      _
    $region59: #{tpu_custom_call.1} parent=1 // pred_check_branch
      %135 = sbr.rel (0) target = $region61
    $region60: #{tpu_custom_call.1} parent=1 // pred_region
      %137 = dma.done [#allocation13], 256
    $region61: #{tpu_custom_call.1} parent=1 // pred_fallthru
      _
    // Predicated region
    $region62: #{tpu_custom_call.1} parent=1 // pred_check
      _
    $region63: #{tpu_custom_call.1} parent=1 // pred_check_branch
      %139 = sbr.rel (0) target = $region65
    $region64: #{tpu_custom_call.1} parent=1 // pred_region
      %141 = dma.done [#allocation13], 256
    $region65: #{tpu_custom_call.1} parent=1 // pred_fallthru
      _
    %v143 = vld [vmem:[#allocation3] sm:$0xff]
    %v144 = vld [vmem:[#allocation3 + $0x8] sm:$0xff]
    %v145 = vld [vmem:[#allocation6] sm:$0xff]
    %v146 = vld [vmem:[#allocation6 + $0x8] sm:$0xff]
    %v147 = vld [vmem:[#allocation8] sm:$0xff]
    %v148 = vld [vmem:[#allocation8 + $0x8] sm:$0xff]
    %v149 = vpack.c.bf16 %v144, %v143
    %v150 = vpack.c.bf16 %v146, %v145
    %v151 = vpack.c.bf16 %v148, %v147
    %v152 = vld [vmem:[#allocation9] sm:$0xf]
    %v153 = vld [vmem:[#allocation9 + $0x4] sm:$0xf]
    %v154 = vld [vmem:[#allocation9 + $0x8] sm:$0xf]
    %v155 = vld [vmem:[#allocation9 + $0xc] sm:$0xf]
    %v160 = vunpack.c.l.b16 %v152
    %v161 = vunpack.c.l.b16 %v153
    %v162 = vunpack.c.l.b16 %v154
    %v163 = vunpack.c.l.b16 %v155
    %v164 = vpack.c.b16 %v161, %v160
    %v165 = vpack.c.b16 %v163, %v162
    %vm168 = vcmask 261120
    %v170 = vsel %vm168, %v149, 0
    %172 = vmatpush.bf16.msra.mxu0 0
    %173 = vmatpush.bf16.msra.mxu0 0
    %174 = vmatpush.bf16.msra.mxu0 0
    %175 = vmatpush.bf16.msra.mxu0 0
    %176 = vmatpush.bf16.msra.mxu0 0
    %177 = vmatpush.bf16.msra.mxu0 0
    %178 = vmatpush.bf16.msra.mxu0 %v165
    %179 = vmatpush.bf16.msra.mxu0 %v164
    %180 = vmatmul.bf16.gmra.mxu0 %v170
    %v181 = vpop.f32.mrf.mxu0
    %v182 = vadd.f32 0.0, %v181
    %v183 = vpop.f32.mrf.mxu0
    %v184 = vadd.f32 0.0, %v183
    %185 = vdwg.mxu0
    %v186 = vld [vmem:[#allocation11] sm:$0xf]
    %v187 = vld [vmem:[#allocation11 + $0x4] sm:$0xf]
    %v188 = vld [vmem:[#allocation11 + $0x8] sm:$0xf]
    %v189 = vld [vmem:[#allocation11 + $0xc] sm:$0xf]
    %v194 = vunpack.c.l.b16 %v186
    %v195 = vunpack.c.l.b16 %v187
    %v196 = vunpack.c.l.b16 %v188
    %v197 = vunpack.c.l.b16 %v189
    %v198 = vpack.c.b16 %v195, %v194
    %v199 = vpack.c.b16 %v197, %v196
    %v203 = vsel %vm168, %v150, 0
    %205 = vmatpush.bf16.msra.mxu0 0
    %206 = vmatpush.bf16.msra.mxu0 0
    %207 = vmatpush.bf16.msra.mxu0 0
    %208 = vmatpush.bf16.msra.mxu0 0
    %209 = vmatpush.bf16.msra.mxu0 0
    %210 = vmatpush.bf16.msra.mxu0 0
    %211 = vmatpush.bf16.msra.mxu0 %v199
    %212 = vmatpush.bf16.msra.mxu0 %v198
    %213 = vmatmul.bf16.gmra.mxu0 %v203
    %v214 = vpop.f32.mrf.mxu0
    %v215 = vadd.f32 0.0, %v214
    %v216 = vpop.f32.mrf.mxu0
    %v217 = vadd.f32 0.0, %v216
    %218 = vdwg.mxu0
    %v219 = vld [vmem:[#allocation12] sm:$0xf]
    %v220 = vld [vmem:[#allocation12 + $0x4] sm:$0xf]
    %v221 = vld [vmem:[#allocation12 + $0x8] sm:$0xf]
    %v222 = vld [vmem:[#allocation12 + $0xc] sm:$0xf]
    %v227 = vunpack.c.l.b16 %v219
    %v228 = vunpack.c.l.b16 %v220
    %v229 = vunpack.c.l.b16 %v221
    %v230 = vunpack.c.l.b16 %v222
    %v231 = vpack.c.b16 %v228, %v227
    %v232 = vpack.c.b16 %v230, %v229
    %v236 = vsel %vm168, %v151, 0
    %238 = vmatpush.bf16.msra.mxu0 0
    %239 = vmatpush.bf16.msra.mxu0 0
    %240 = vmatpush.bf16.msra.mxu0 0
    %241 = vmatpush.bf16.msra.mxu0 0
    %242 = vmatpush.bf16.msra.mxu0 0
    %243 = vmatpush.bf16.msra.mxu0 0
    %244 = vmatpush.bf16.msra.mxu0 %v232
    %245 = vmatpush.bf16.msra.mxu0 %v231
    %246 = vmatmul.bf16.gmra.mxu0 %v236
    %v247 = vpop.f32.mrf.mxu0
    %v248 = vadd.f32 0.0, %v247
    %v249 = vpop.f32.mrf.mxu0
    %v250 = vadd.f32 0.0, %v249
    %251 = vdwg.mxu0
    %v252 = vpack.c.bf16 %v182, %v182
    %v253 = vpack.c.bf16 %v184, %v184
    %v254 = vpack.c.bf16 %v215, %v215
    %v255 = vpack.c.bf16 %v217, %v217
    %v256 = vpack.c.bf16 %v248, %v248
    %v257 = vpack.c.bf16 %v250, %v250
    %vm258 = vcmask 64512
    %v260 = vsel %vm258, %v252, 0
    %v263 = vsel %vm258, %v254, 0
    %265 = vmatpush.bf16.xpose.msra.mxu0 0
    %266 = vmatpush.bf16.xpose.msra.mxu0 0
    %267 = vmatpush.bf16.xpose.msra.mxu0 0
    %268 = vmatpush.bf16.xpose.msra.mxu0 0
    %269 = vmatpush.bf16.xpose.msra.mxu0 0
    %270 = vmatpush.bf16.xpose.msra.mxu0 0
    %271 = vmatpush.bf16.xpose.msra.mxu0 0
    %272 = vmatpush.bf16.xpose.msra.mxu0 %v263
    %273 = vmatmul.bf16.gmra.mxu0 %v260
    %v274 = vpop.f32.mrf.mxu0
    %v275 = vadd.f32 0.0, %v274
    %v276 = vpop.f32.mrf.mxu0
    %277 = vdwg.mxu0
    %v279 = vsel %vm258, %v253, 0
    %v282 = vsel %vm258, %v255, 0
    %284 = vmatpush.bf16.xpose.msra.mxu0 0
    %285 = vmatpush.bf16.xpose.msra.mxu0 0
    %286 = vmatpush.bf16.xpose.msra.mxu0 0
    %287 = vmatpush.bf16.xpose.msra.mxu0 0
    %288 = vmatpush.bf16.xpose.msra.mxu0 0
    %289 = vmatpush.bf16.xpose.msra.mxu0 0
    %290 = vmatpush.bf16.xpose.msra.mxu0 0
    %291 = vmatpush.bf16.xpose.msra.mxu0 %v282
    %292 = vmatmul.bf16.gmra.mxu0 %v279
    %v293 = vpop.f32.mrf.mxu0
    %v294 = vadd.f32 0.0, %v293
    %v295 = vpop.f32.mrf.mxu0
    %296 = vdwg.mxu0
    %v297 = vsel %vm258, %v275, -inf
    %298 = vmax.xlane.f32.xlu0 %v297
    %v299 = vpop.xlane.xlu0 %298
    %v300 = vsel %vm258, %v294, -inf
    %301 = vmax.xlane.f32.xlu0 %v300
    %v302 = vpop.xlane.xlu0 %301
    %v303 = vsub.f32 %v275, %v299
    %v304 = vsub.f32 %v294, %v302
    %v305 = vmul.f32 %v303, 1.442695
    %v306 = vpow.pop %v305
    %v307 = vmul.f32 %v304, 1.442695
    %v308 = vpow.pop %v307
    %v309 = vsel %vm258, %v306, 0.0
    %310 = vadd.xlane.f32.xlu0 %v309
    %v311 = vpop.xlane.xlu0 %310
    %v312 = vsel %vm258, %v308, 0.0
    %313 = vadd.xlane.f32.xlu0 %v312
    %v314 = vpop.xlane.xlu0 %313
    %v315 = vpack.c.bf16 %v306, %v306
    %v316 = vpack.c.bf16 %v308, %v308
    %v318 = vsel %vm258, %v315, 0
    %vm320 = vcmask 1043456
    %v322 = vsel %vm320, %v256, 0
    %324 = vmatpush.bf16.msra.mxu0 0
    %325 = vmatpush.bf16.msra.mxu0 0
    %326 = vmatpush.bf16.msra.mxu0 0
    %327 = vmatpush.bf16.msra.mxu0 0
    %328 = vmatpush.bf16.msra.mxu0 0
    %329 = vmatpush.bf16.msra.mxu0 0
    %330 = vmatpush.bf16.msra.mxu0 0
    %331 = vmatpush.bf16.msra.mxu0 %v322
    %332 = vmatmul.bf16.gmra.mxu0 %v318
    %v333 = vpop.f32.mrf.mxu0
    %v334 = vadd.f32 0.0, %v333
    %v335 = vpop.f32.mrf.mxu0
    %336 = vdwg.mxu0
    %v338 = vsel %vm258, %v316, 0
    %v341 = vsel %vm320, %v257, 0
    %343 = vmatpush.bf16.msra.mxu0 0
    %344 = vmatpush.bf16.msra.mxu0 0
    %345 = vmatpush.bf16.msra.mxu0 0
    %346 = vmatpush.bf16.msra.mxu0 0
    %347 = vmatpush.bf16.msra.mxu0 0
    %348 = vmatpush.bf16.msra.mxu0 0
    %349 = vmatpush.bf16.msra.mxu0 0
    %350 = vmatpush.bf16.msra.mxu0 %v341
    %351 = vmatmul.bf16.gmra.mxu0 %v338
    %v352 = vpop.f32.mrf.mxu0
    %v353 = vadd.f32 0.0, %v352
    %v354 = vpop.f32.mrf.mxu0
    %355 = vdwg.mxu0
    %v356 = vrcp.pop %v311
    %v357 = vrcp.pop %v314
    %v358 = vmul.f32 %v334, %v356
    %v359 = vmul.f32 %v353, %v357
    %360 = vst.msk [vmem:[#allocation2] sm:$0xff] %vm258, %v358
    %361 = vst.msk [vmem:[#allocation2 + $0x8] sm:$0xff] %vm258, %v359
    %v363 = vunpack.c.l.b16 %v252
    %v364 = vpack.c.b16 %v363, %v363
    %365 = vrot.lane.b32.xlu0 %v364, 120
    %v366 = vpop.permute.xlu0 %365
    %v368 = vunpack.c.l.b16 %v254
    %v369 = vpack.c.b16 %v368, %v368
    %370 = vrot.lane.b32.xlu0 %v369, 120
    %v371 = vpop.permute.xlu0 %370
    %v373 = vsel %vm258, %v366, 0
    %v376 = vsel %vm258, %v371, 0
    %378 = vmatpush.bf16.xpose.msra.mxu0 0
    %379 = vmatpush.bf16.xpose.msra.mxu0 0
    %380 = vmatpush.bf16.xpose.msra.mxu0 0
    %381 = vmatpush.bf16.xpose.msra.mxu0 0
    %382 = vmatpush.bf16.xpose.msra.mxu0 0
    %383 = vmatpush.bf16.xpose.msra.mxu0 0
    %384 = vmatpush.bf16.xpose.msra.mxu0 0
    %385 = vmatpush.bf16.xpose.msra.mxu0 %v376
    %386 = vmatmul.bf16.gmra.mxu0 %v373
    %v387 = vpop.f32.mrf.mxu0
    %v388 = vadd.f32 0.0, %v387
    %v389 = vpop.f32.mrf.mxu0
    %390 = vdwg.mxu0
    %v392 = vunpack.c.l.b16 %v253
    %v393 = vpack.c.b16 %v392, %v392
    %394 = vrot.lane.b32.xlu0 %v393, 120
    %v395 = vpop.permute.xlu0 %394
    %v397 = vunpack.c.l.b16 %v255
    %v398 = vpack.c.b16 %v397, %v397
    %399 = vrot.lane.b32.xlu0 %v398, 120
    %v400 = vpop.permute.xlu0 %399
    %v402 = vsel %vm258, %v395, 0
    %v405 = vsel %vm258, %v400, 0
    %407 = vmatpush.bf16.xpose.msra.mxu0 0
    %408 = vmatpush.bf16.xpose.msra.mxu0 0
    %409 = vmatpush.bf16.xpose.msra.mxu0 0
    %410 = vmatpush.bf16.xpose.msra.mxu0 0
    %411 = vmatpush.bf16.xpose.msra.mxu0 0
    %412 = vmatpush.bf16.xpose.msra.mxu0 0
    %413 = vmatpush.bf16.xpose.msra.mxu0 0
    %414 = vmatpush.bf16.xpose.msra.mxu0 %v405
    %415 = vmatmul.bf16.gmra.mxu0 %v402
    %v416 = vpop.f32.mrf.mxu0
    %v417 = vadd.f32 0.0, %v416
    %v418 = vpop.f32.mrf.mxu0
    %419 = vdwg.mxu0
    %v420 = vsel %vm258, %v388, -inf
    %421 = vmax.xlane.f32.xlu0 %v420
    %v422 = vpop.xlane.xlu0 %421
    %v423 = vsel %vm258, %v417, -inf
    %424 = vmax.xlane.f32.xlu0 %v423
    %v425 = vpop.xlane.xlu0 %424
    %v426 = vsub.f32 %v388, %v422
    %v427 = vsub.f32 %v417, %v425
    %v428 = vmul.f32 %v426, 1.442695
    %v429 = vpow.pop %v428
    %v430 = vmul.f32 %v427, 1.442695
    %v431 = vpow.pop %v430
    %v432 = vsel %vm258, %v429, 0.0
    %433 = vadd.xlane.f32.xlu0 %v432
    %v434 = vpop.xlane.xlu0 %433
    %v435 = vsel %vm258, %v431, 0.0
    %436 = vadd.xlane.f32.xlu0 %v435
    %v437 = vpop.xlane.xlu0 %436
    %v438 = vpack.c.bf16 %v429, %v429
    %v439 = vpack.c.bf16 %v431, %v431
    %v441 = vunpack.c.l.b16 %v256
    %v442 = vpack.c.b16 %v441, %v441
    %443 = vrot.lane.b32.xlu0 %v442, 120
    %v444 = vpop.permute.xlu0 %443
    %v446 = vsel %vm258, %v438, 0
    %v449 = vsel %vm320, %v444, 0
    %451 = vmatpush.bf16.msra.mxu0 0
    %452 = vmatpush.bf16.msra.mxu0 0
    %453 = vmatpush.bf16.msra.mxu0 0
    %454 = vmatpush.bf16.msra.mxu0 0
    %455 = vmatpush.bf16.msra.mxu0 0
    %456 = vmatpush.bf16.msra.mxu0 0
    %457 = vmatpush.bf16.msra.mxu0 0
    %458 = vmatpush.bf16.msra.mxu0 %v449
    %459 = vmatmul.bf16.gmra.mxu0 %v446
    %v460 = vpop.f32.mrf.mxu0
    %v461 = vadd.f32 0.0, %v460
    %v462 = vpop.f32.mrf.mxu0
    %463 = vdwg.mxu0
    %v465 = vunpack.c.l.b16 %v257
    %v466 = vpack.c.b16 %v465, %v465
    %467 = vrot.lane.b32.xlu0 %v466, 120
    %v468 = vpop.permute.xlu0 %467
    %v470 = vsel %vm258, %v439, 0
    %v473 = vsel %vm320, %v468, 0
    %475 = vmatpush.bf16.msra.mxu0 0
    %476 = vmatpush.bf16.msra.mxu0 0
    %477 = vmatpush.bf16.msra.mxu0 0
    %478 = vmatpush.bf16.msra.mxu0 0
    %479 = vmatpush.bf16.msra.mxu0 0
    %480 = vmatpush.bf16.msra.mxu0 0
    %481 = vmatpush.bf16.msra.mxu0 0
    %482 = vmatpush.bf16.msra.mxu0 %v473
    %483 = vmatmul.bf16.gmra.mxu0 %v470
    %v484 = vpop.f32.mrf.mxu0
    %v485 = vadd.f32 0.0, %v484
    %v486 = vpop.f32.mrf.mxu0
    %487 = vdwg.mxu0
    %v488 = vrcp.pop %v434
    %v489 = vrcp.pop %v437
    %v490 = vmul.f32 %v461, %v488
    %v491 = vmul.f32 %v485, %v489
    %494 = vrot.lane.b32.xlu0 %v490, 8
    %v495 = vpop.permute.xlu0 %494
    %496 = vrot.lane.b32.xlu0 %v491, 8
    %v497 = vpop.permute.xlu0 %496
    %vm500 = vcmask 130112
    %501 = vst.msk [vmem:[#allocation2] sm:$0xff] %vm500, %v495
    %502 = vst.msk [vmem:[#allocation2 + $0x8] sm:$0xff] %vm500, %v497
    %503 = vrot.lane.b32.xlu0 %v364, 112
    %v504 = vpop.permute.xlu0 %503
    %505 = vrot.lane.b32.xlu0 %v369, 112
    %v506 = vpop.permute.xlu0 %505
    %v508 = vsel %vm258, %v504, 0
    %v511 = vsel %vm258, %v506, 0
    %513 = vmatpush.bf16.xpose.msra.mxu0 0
    %514 = vmatpush.bf16.xpose.msra.mxu0 0
    %515 = vmatpush.bf16.xpose.msra.mxu0 0
    %516 = vmatpush.bf16.xpose.msra.mxu0 0
    %517 = vmatpush.bf16.xpose.msra.mxu0 0
    %518 = vmatpush.bf16.xpose.msra.mxu0 0
    %519 = vmatpush.bf16.xpose.msra.mxu0 0
    %520 = vmatpush.bf16.xpose.msra.mxu0 %v511
    %521 = vmatmul.bf16.gmra.mxu0 %v508
    %v522 = vpop.f32.mrf.mxu0
    %v523 = vadd.f32 0.0, %v522
    %v524 = vpop.f32.mrf.mxu0
    %525 = vdwg.mxu0
    %526 = vrot.lane.b32.xlu0 %v393, 112
    %v527 = vpop.permute.xlu0 %526
    %528 = vrot.lane.b32.xlu0 %v398, 112
    %v529 = vpop.permute.xlu0 %528
    %v531 = vsel %vm258, %v527, 0
    %v534 = vsel %vm258, %v529, 0
    %536 = vmatpush.bf16.xpose.msra.mxu0 0
    %537 = vmatpush.bf16.xpose.msra.mxu0 0
    %538 = vmatpush.bf16.xpose.msra.mxu0 0
    %539 = vmatpush.bf16.xpose.msra.mxu0 0
    %540 = vmatpush.bf16.xpose.msra.mxu0 0
    %541 = vmatpush.bf16.xpose.msra.mxu0 0
    %542 = vmatpush.bf16.xpose.msra.mxu0 0
    %543 = vmatpush.bf16.xpose.msra.mxu0 %v534
    %544 = vmatmul.bf16.gmra.mxu0 %v531
    %v545 = vpop.f32.mrf.mxu0
    %v546 = vadd.f32 0.0, %v545
    %v547 = vpop.f32.mrf.mxu0
    %548 = vdwg.mxu0
    %v549 = vsel %vm258, %v523, -inf
    %550 = vmax.xlane.f32.xlu0 %v549
    %v551 = vpop.xlane.xlu0 %550
    %v552 = vsel %vm258, %v546, -inf
    %553 = vmax.xlane.f32.xlu0 %v552
    %v554 = vpop.xlane.xlu0 %553
    %v555 = vsub.f32 %v523, %v551
    %v556 = vsub.f32 %v546, %v554
    %v557 = vmul.f32 %v555, 1.442695
    %v558 = vpow.pop %v557
    %v559 = vmul.f32 %v556, 1.442695
    %v560 = vpow.pop %v559
    %v561 = vsel %vm258, %v558, 0.0
    %562 = vadd.xlane.f32.xlu0 %v561
    %v563 = vpop.xlane.xlu0 %562
    %v564 = vsel %vm258, %v560, 0.0
    %565 = vadd.xlane.f32.xlu0 %v564
    %v566 = vpop.xlane.xlu0 %565
    %v567 = vpack.c.bf16 %v558, %v558
    %v568 = vpack.c.bf16 %v560, %v560
    %569 = vrot.lane.b32.xlu0 %v442, 112
    %v570 = vpop.permute.xlu0 %569
    %v572 = vsel %vm258, %v567, 0
    %v575 = vsel %vm320, %v570, 0
    %577 = vmatpush.bf16.msra.mxu0 0
    %578 = vmatpush.bf16.msra.mxu0 0
    %579 = vmatpush.bf16.msra.mxu0 0
    %580 = vmatpush.bf16.msra.mxu0 0
    %581 = vmatpush.bf16.msra.mxu0 0
    %582 = vmatpush.bf16.msra.mxu0 0
    %583 = vmatpush.bf16.msra.mxu0 0
    %584 = vmatpush.bf16.msra.mxu0 %v575
    %585 = vmatmul.bf16.gmra.mxu0 %v572
    %v586 = vpop.f32.mrf.mxu0
    %v587 = vadd.f32 0.0, %v586
    %v588 = vpop.f32.mrf.mxu0
    %589 = vdwg.mxu0
    %590 = vrot.lane.b32.xlu0 %v466, 112
    %v591 = vpop.permute.xlu0 %590
    %v593 = vsel %vm258, %v568, 0
    %v596 = vsel %vm320, %v591, 0
    %598 = vmatpush.bf16.msra.mxu0 0
    %599 = vmatpush.bf16.msra.mxu0 0
    %600 = vmatpush.bf16.msra.mxu0 0
    %601 = vmatpush.bf16.msra.mxu0 0
    %602 = vmatpush.bf16.msra.mxu0 0
    %603 = vmatpush.bf16.msra.mxu0 0
    %604 = vmatpush.bf16.msra.mxu0 0
    %605 = vmatpush.bf16.msra.mxu0 %v596
    %606 = vmatmul.bf16.gmra.mxu0 %v593
    %v607 = vpop.f32.mrf.mxu0
    %v608 = vadd.f32 0.0, %v607
    %v609 = vpop.f32.mrf.mxu0
    %610 = vdwg.mxu0
    %v611 = vrcp.pop %v563
    %v612 = vrcp.pop %v566
    %v613 = vmul.f32 %v587, %v611
    %v614 = vmul.f32 %v608, %v612
    %617 = vrot.lane.b32.xlu0 %v613, 16
    %v618 = vpop.permute.xlu0 %617
    %619 = vrot.lane.b32.xlu0 %v614, 16
    %v620 = vpop.permute.xlu0 %619
    %vm623 = vcmask 195712
    %624 = vst.msk [vmem:[#allocation2] sm:$0xff] %vm623, %v618
    %625 = vst.msk [vmem:[#allocation2 + $0x8] sm:$0xff] %vm623, %v620
    %626 = vrot.lane.b32.xlu0 %v364, 104
    %v627 = vpop.permute.xlu0 %626
    %628 = vrot.lane.b32.xlu0 %v369, 104
    %v629 = vpop.permute.xlu0 %628
    %v631 = vsel %vm258, %v627, 0
    %v634 = vsel %vm258, %v629, 0
    %636 = vmatpush.bf16.xpose.msra.mxu0 0
    %637 = vmatpush.bf16.xpose.msra.mxu0 0
    %638 = vmatpush.bf16.xpose.msra.mxu0 0
    %639 = vmatpush.bf16.xpose.msra.mxu0 0
    %640 = vmatpush.bf16.xpose.msra.mxu0 0
    %641 = vmatpush.bf16.xpose.msra.mxu0 0
    %642 = vmatpush.bf16.xpose.msra.mxu0 0
    %643 = vmatpush.bf16.xpose.msra.mxu0 %v634
    %644 = vmatmul.bf16.gmra.mxu0 %v631
    %v645 = vpop.f32.mrf.mxu0
    %v646 = vadd.f32 0.0, %v645
    %v647 = vpop.f32.mrf.mxu0
    %648 = vdwg.mxu0
    %649 = vrot.lane.b32.xlu0 %v393, 104
    %v650 = vpop.permute.xlu0 %649
    %651 = vrot.lane.b32.xlu0 %v398, 104
    %v652 = vpop.permute.xlu0 %651
    %v654 = vsel %vm258, %v650, 0
    %v657 = vsel %vm258, %v652, 0
    %659 = vmatpush.bf16.xpose.msra.mxu0 0
    %660 = vmatpush.bf16.xpose.msra.mxu0 0
    %661 = vmatpush.bf16.xpose.msra.mxu0 0
    %662 = vmatpush.bf16.xpose.msra.mxu0 0
    %663 = vmatpush.bf16.xpose.msra.mxu0 0
    %664 = vmatpush.bf16.xpose.msra.mxu0 0
    %665 = vmatpush.bf16.xpose.msra.mxu0 0
    %666 = vmatpush.bf16.xpose.msra.mxu0 %v657
    %667 = vmatmul.bf16.gmra.mxu0 %v654
    %v668 = vpop.f32.mrf.mxu0
    %v669 = vadd.f32 0.0, %v668
    %v670 = vpop.f32.mrf.mxu0
    %671 = vdwg.mxu0
    %v672 = vsel %vm258, %v646, -inf
    %673 = vmax.xlane.f32.xlu0 %v672
    %v674 = vpop.xlane.xlu0 %673
    %v675 = vsel %vm258, %v669, -inf
    %676 = vmax.xlane.f32.xlu0 %v675
    %v677 = vpop.xlane.xlu0 %676
    %v678 = vsub.f32 %v646, %v674
    %v679 = vsub.f32 %v669, %v677
    %v680 = vmul.f32 %v678, 1.442695
    %v681 = vpow.pop %v680
    %v682 = vmul.f32 %v679, 1.442695
    %v683 = vpow.pop %v682
    %v684 = vsel %vm258, %v681, 0.0
    %685 = vadd.xlane.f32.xlu0 %v684
    %v686 = vpop.xlane.xlu0 %685
    %v687 = vsel %vm258, %v683, 0.0
    %688 = vadd.xlane.f32.xlu0 %v687
    %v689 = vpop.xlane.xlu0 %688
    %v690 = vpack.c.bf16 %v681, %v681
    %v691 = vpack.c.bf16 %v683, %v683
    %692 = vrot.lane.b32.xlu0 %v442, 104
    %v693 = vpop.permute.xlu0 %692
    %v695 = vsel %vm258, %v690, 0
    %v698 = vsel %vm320, %v693, 0
    %700 = vmatpush.bf16.msra.mxu0 0
    %701 = vmatpush.bf16.msra.mxu0 0
    %702 = vmatpush.bf16.msra.mxu0 0
    %703 = vmatpush.bf16.msra.mxu0 0
    %704 = vmatpush.bf16.msra.mxu0 0
    %705 = vmatpush.bf16.msra.mxu0 0
    %706 = vmatpush.bf16.msra.mxu0 0
    %707 = vmatpush.bf16.msra.mxu0 %v698
    %708 = vmatmul.bf16.gmra.mxu0 %v695
    %v709 = vpop.f32.mrf.mxu0
    %v710 = vadd.f32 0.0, %v709
    %v711 = vpop.f32.mrf.mxu0
    %712 = vdwg.mxu0
    %713 = vrot.lane.b32.xlu0 %v466, 104
    %v714 = vpop.permute.xlu0 %713
    %v716 = vsel %vm258, %v691, 0
    %v719 = vsel %vm320, %v714, 0
    %721 = vmatpush.bf16.msra.mxu0 0
    %722 = vmatpush.bf16.msra.mxu0 0
    %723 = vmatpush.bf16.msra.mxu0 0
    %724 = vmatpush.bf16.msra.mxu0 0
    %725 = vmatpush.bf16.msra.mxu0 0
    %726 = vmatpush.bf16.msra.mxu0 0
    %727 = vmatpush.bf16.msra.mxu0 0
    %728 = vmatpush.bf16.msra.mxu0 %v719
    %729 = vmatmul.bf16.gmra.mxu0 %v716
    %v730 = vpop.f32.mrf.mxu0
    %v731 = vadd.f32 0.0, %v730
    %v732 = vpop.f32.mrf.mxu0
    %733 = vdwg.mxu0
    %v734 = vrcp.pop %v686
    %v735 = vrcp.pop %v689
    %v736 = vmul.f32 %v710, %v734
    %v737 = vmul.f32 %v731, %v735
    %740 = vrot.lane.b32.xlu0 %v736, 24
    %v741 = vpop.permute.xlu0 %740
    %742 = vrot.lane.b32.xlu0 %v737, 24
    %v743 = vpop.permute.xlu0 %742
    %vm746 = vcmask 261312
    %747 = vst.msk [vmem:[#allocation2] sm:$0xff] %vm746, %v741
    %748 = vst.msk [vmem:[#allocation2 + $0x8] sm:$0xff] %vm746, %v743
    %v749 = vld [vmem:[#allocation2] sm:$0xff]
    %v750 = vld [vmem:[#allocation2 + $0x8] sm:$0xff]
    %v751 = vpack.c.bf16 %v750, %v749
    %v752 = vld [vmem:[#allocation14] sm:$0xf]
    %v753 = vld [vmem:[#allocation14 + $0x4] sm:$0xf]
    %v754 = vld [vmem:[#allocation14 + $0x8] sm:$0xf]
    %v755 = vld [vmem:[#allocation14 + $0xc] sm:$0xf]
    %v760 = vunpack.c.l.b16 %v752
    %v761 = vunpack.c.l.b16 %v753
    %v762 = vunpack.c.l.b16 %v754
    %v763 = vunpack.c.l.b16 %v755
    %v764 = vpack.c.b16 %v761, %v760
    %v765 = vpack.c.b16 %v763, %v762
    %v769 = vsel %vm168, %v751, 0
    %771 = vmatpush.bf16.msra.mxu0 0
    %772 = vmatpush.bf16.msra.mxu0 0
    %773 = vmatpush.bf16.msra.mxu0 0
    %774 = vmatpush.bf16.msra.mxu0 0
    %775 = vmatpush.bf16.msra.mxu0 0
    %776 = vmatpush.bf16.msra.mxu0 0
    %777 = vmatpush.bf16.msra.mxu0 %v765
    %778 = vmatpush.bf16.msra.mxu0 %v764
    %779 = vmatmul.bf16.gmra.mxu0 %v769
    %v780 = vpop.f32.mrf.mxu0
    %v781 = vadd.f32 0.0, %v780
    %v782 = vpop.f32.mrf.mxu0
    %v783 = vadd.f32 0.0, %v782
    %784 = vdwg.mxu0
    %v785 = vadd.f32 %v143, %v781
    %v786 = vadd.f32 %v144, %v783
    %v787 = vsel %vm168, %v785, 0.0
    %788 = vadd.xlane.f32.xlu0 %v787
    %v789 = vpop.xlane.xlu0 %788
    %v790 = vsel %vm168, %v786, 0.0
    %791 = vadd.xlane.f32.xlu0 %v790
    %v792 = vpop.xlane.xlu0 %791
    %v793 = vrcp.pop 32.0
    %v794 = vmul.f32 32.0, %v793
    %v795 = vsub.f32 1.0, %v794
    %v796 = vmul.f32 %v793, %v795
    %v797 = vadd.f32 %v793, %v796
    %vm798 = vweird.f32 %v793
    %v799 = vsel %vm798, %v793, %v797
    %v800 = vmul.f32 %v789, %v799
    %v801 = vmul.f32 %v792, %v799
    %v802 = vsub.f32 %v785, %v800
    %v803 = vsub.f32 %v786, %v801
    %v804 = vmul.f32 %v802, %v802
    %v805 = vmul.f32 %v803, %v803
    %v806 = vsel %vm168, %v804, 0.0
    %807 = vadd.xlane.f32.xlu0 %v806
    %v808 = vpop.xlane.xlu0 %807
    %v809 = vsel %vm168, %v805, 0.0
    %810 = vadd.xlane.f32.xlu0 %v809
    %v811 = vpop.xlane.xlu0 %810
    %v812 = vmul.f32 %v808, %v799
    %v813 = vmul.f32 %v811, %v799
    %v814 = vadd.f32 %v812, 1e-05
    %v815 = vadd.f32 %v813, 1e-05
    %v816 = vrsqrt.pop %v814
    %v817 = vmul.f32 %v816, %v814
    %v818 = vmul.f32 %v817, %v816
    %v819 = vmul.f32 0.5, %v818
    %v820 = vsub.f32 1.5, %v819
    %v821 = vmul.f32 %v816, %v820
    %vm822 = vweird.f32 %v814
    %vm823 = vweird.f32 %v816
    %vm824 = vmor %vm822, %vm823
    %v825 = vsel %vm824, %v816, %v821
    %v826 = vrsqrt.pop %v815
    %v827 = vmul.f32 %v826, %v815
    %v828 = vmul.f32 %v827, %v826
    %v829 = vmul.f32 0.5, %v828
    %v830 = vsub.f32 1.5, %v829
    %v831 = vmul.f32 %v826, %v830
    %vm832 = vweird.f32 %v815
    %vm833 = vweird.f32 %v826
    %vm834 = vmor %vm832, %vm833
    %v835 = vsel %vm834, %v826, %v831
    %v836 = vmul.f32 %v802, %v825
    %v837 = vmul.f32 %v803, %v835
    %v838 = vld [vmem:[%s7] sm:$0x1]
    %v840 = vperm.slane %v838, 0
    %v842 = vmul.f32 %v836, %v840
    %v843 = vmul.f32 %v837, %v840
    %v844 = vld [vmem:[%s8] sm:$0x1]
    %v846 = vperm.slane %v844, 0
    %v848 = vadd.f32 %v842, %v846
    %v849 = vadd.f32 %v843, %v846
    %850 = vst.msk [vmem:[#allocation15] sm:$0xff] %vm168, %v848
    %851 = vst.msk [vmem:[#allocation15 + $0x8] sm:$0xff] %vm168, %v849
    // Predicated region
    $region66: #{tpu_custom_call.1} parent=1 // pred_check
      _
    $region67: #{tpu_custom_call.1} parent=1 // pred_check_branch
      %853 = sbr.rel (0) target = $region69
    $region68: #{tpu_custom_call.1} parent=1 // pred_region
      %855 = vsyncadd [#allocation5], 0
      %s856 = sshll.u32 [#allocation15], 4
      %s857 = int_to_ptr.vmem [resolvable:$true] %s856
      %s858 = sshll.u32 %s9, 4
      %s859 = int_to_ptr.hbm [resolvable:$true] %s858
      %864 = dma.vmem_to_hbm [thread:$0]  %s857, 256, %s859, [#allocation5], 128, 128, 8
    $region69: #{tpu_custom_call.1} parent=1 // pred_fallthru
      _
    // Predicated region
    $region70: #{tpu_custom_call.1} parent=1 // pred_check
      _
    $region71: #{tpu_custom_call.1} parent=1 // pred_check_branch
      %866 = sbr.rel (0) target = $region73
    $region72: #{tpu_custom_call.1} parent=1 // pred_region
      %868 = dma.done [#allocation5], 256
    $region73: #{tpu_custom_call.1} parent=1 // pred_fallthru
      _
    %869 = vsyncpa [#allocation4], 1
    %870 = vsyncpa [#allocation7], 1
    %871 = vsyncpa [#allocation10], 1
    %872 = vsyncpa [#allocation13], 1
    %873 = vsyncpa [#allocation5], 1

</llo_original>
